<compile_context>
chip_gen: v5e
topology: v5e:2x2
jax: 0.10.0
libtpu: 0.0.40
codegen_flags: <defaults>
</compile_context>

<pallas_src>
import functools

import jax
import jax.numpy as jnp
from jax.experimental import pallas as pl
from jax.experimental.pallas import tpu as pltpu


_MXU_MIN_DEPTH = 32  # below this, contract on the VPU (MXU would be mostly idle)


def _apply_activation(x, activation):
    a = activation.lower()
    if a == "relu":
        return jnp.maximum(x, 0.0)
    if a == "elu":
        return jnp.where(x > 0, x, jnp.expm1(jnp.minimum(x, 0.0)))
    if a == "selu":
        alpha = 1.6732632423543772
        scale = 1.0507009873554805
        return scale * jnp.where(x > 0, x, alpha * jnp.expm1(jnp.minimum(x, 0.0)))
    if a == "gelu":
        return jax.nn.gelu(x, approximate=False)
    raise ValueError(
        "The activation must have one of the following string: relu, elu, selu, gelu"
    )


def _contract(w, x, use_mxu):
    # w: (Dout, D) f32, x: (D, T) f32 -> (Dout, T) f32
    if use_mxu:
        return jnp.dot(w, x, preferred_element_type=jnp.float32)
    # Small-depth path: unrolled broadcast-multiply-accumulate on the VPU.
    # Lane dim (spatial T) stays dense; VALU slots have plenty of slack in a
    # memory-bound kernel, so these FMAs are effectively free.
    acc = w[:, 0:1] * x[0:1, :]
    for k in range(1, w.shape[1]):
        acc = acc + w[:, k:k + 1] * x[k:k + 1, :]
    return acc


def _pointwise_conv_kernel(x_ref, wm_ref, wv_ref, bm_ref, bv_ref,
                           mean_ref, logvar_ref, *,
                           use_activation, activation, use_mxu):
    # x_ref: (D, tHW) lane-dense spatial tile (batch dim squeezed out)
    x = x_ref[...].astype(jnp.float32)
    if use_activation:
        x = _apply_activation(x, activation)

    wm = wm_ref[...].astype(jnp.float32)            # (D, D)
    wv = wv_ref[...].astype(jnp.float32)            # (D, D)

    mean = _contract(wm, x, use_mxu) + bm_ref[...].astype(jnp.float32)   # (D, tHW)
    logv = _contract(wv, x, use_mxu) + bv_ref[...].astype(jnp.float32)   # (D, tHW)

    mean_ref[...] = mean.astype(mean_ref.dtype)
    logvar_ref[...] = logv.astype(logvar_ref.dtype)


def _choose_spatial_tile(HW, D, itemsize, vmem_budget_bytes=16 * 1024 * 1024):
    """Largest spatial tile that (a) is a multiple of 128 dividing HW (or the full
    extent, which is always legal) and (b) keeps double-buffered in+out tiles
    under the VMEM budget: 2 * (x tile + mean tile + logvar tile)."""
    per_elem = 2 * 3 * D * itemsize
    max_t = max(vmem_budget_bytes // per_elem, 1)
    if HW <= 128 or HW % 128 != 0:
        return HW                       # full-extent block is always legal
    t = min(HW, (max_t // 128) * 128)
    t = max(t, 128)
    while HW % t != 0:
        t -= 128
    return t


def map_to_distribution_parameters_with_convolution(
    x, weight, bias, *, use_activation=False, activation="elu"
):
    """x: (B, D, H, W). weight: (2D, D, 1, 1) = Conv2d(D, 2D, 1) weight. bias: (2D,).
    Returns (mean, log_var), each (B, D, H, W)."""
    B, D, H, W = x.shape
    D2 = 2 * D
    assert weight.shape == (D2, D, 1, 1)
    assert bias.shape == (D2,)
    HW = H * W

    # Stay in NCHW: spatial becomes the lane-dense last dim; no relayouts.
    x3 = x.reshape(B, D, HW)
    w2 = weight.reshape(D2, D)
    w_mean, w_logvar = w2[:D], w2[D:]                 # (D, D) each
    b_mean = bias[:D].reshape(D, 1)
    b_logvar = bias[D:].reshape(D, 1)

    itemsize = jnp.dtype(x.dtype).itemsize
    tHW = _choose_spatial_tile(HW, D, itemsize)
    grid = (B, HW // tHW)
    use_mxu = D >= _MXU_MIN_DEPTH

    kernel = functools.partial(
        _pointwise_conv_kernel,
        use_activation=use_activation,
        activation=activation,
        use_mxu=use_mxu,
    )

    flops = 2 * B * HW * D * D2 + B * HW * D2
    transcendentals = (
        B * D * HW if (use_activation and activation.lower() != "relu") else 0
    )
    bytes_accessed = itemsize * (B * D * HW + B * D2 * HW) + 4 * (D * D2 + D2)

    mean3, logvar3 = pl.pallas_call(
        kernel,
        out_shape=(
            jax.ShapeDtypeStruct((B, D, HW), x.dtype),
            jax.ShapeDtypeStruct((B, D, HW), x.dtype),
        ),
        grid_spec=pltpu.PrefetchScalarGridSpec(
            num_scalar_prefetch=0,
            grid=grid,
            in_specs=[
                pl.BlockSpec((None, D, tHW), lambda b, s: (b, 0, s)),  # x
                pl.BlockSpec((D, D), lambda b, s: (0, 0)),             # W_mean
                pl.BlockSpec((D, D), lambda b, s: (0, 0)),             # W_logvar
                pl.BlockSpec((D, 1), lambda b, s: (0, 0)),             # b_mean
                pl.BlockSpec((D, 1), lambda b, s: (0, 0)),             # b_logvar
            ],
            out_specs=(
                pl.BlockSpec((None, D, tHW), lambda b, s: (b, 0, s)),  # mean
                pl.BlockSpec((None, D, tHW), lambda b, s: (b, 0, s)),  # log_var
            ),
        ),
        compiler_params=pltpu.CompilerParams(
            dimension_semantics=("parallel", "parallel"),
            vmem_limit_bytes=32 * 1024 * 1024,
        ),
        cost_estimate=pl.CostEstimate(
            flops=flops,
            transcendentals=transcendentals,
            bytes_accessed=bytes_accessed,
        ),
    )(x3, w_mean, w_logvar, b_mean, b_logvar)

    # Reshape (B, D, H*W) -> (B, D, H, W): metadata only, no data movement.
    return mean3.reshape(B, D, H, W), logvar3.reshape(B, D, H, W)


if __name__ == "__main__":
    key = jax.random.PRNGKey(0)
    B, D, H, W = 2, 4, 16, 16

    kx, kw, kb = jax.random.split(key, 3)
    x = jax.random.normal(kx, (B, D, H, W), dtype=jnp.float32)
    # Deterministic Conv2d(D, 2D, 1) parameter shapes
    weight = jax.random.normal(kw, (2 * D, D, 1, 1), dtype=jnp.float32) * 0.1
    bias = jax.random.normal(kb, (2 * D,), dtype=jnp.float32) * 0.1

    w2 = weight.reshape(2 * D, D)

    def ref_forward(xin, use_activation, activation):
        xa = xin
        if use_activation:
            a = activation.lower()
            if a == "relu":
                xa = jnp.maximum(xin, 0.0)
            elif a == "elu":
                xa = jnp.where(xin > 0, xin, jnp.expm1(xin))
            elif a == "selu":
                alpha = 1.6732632423543772
                scale = 1.0507009873554805
                xa = scale * jnp.where(xin > 0, xin, alpha * jnp.expm1(xin))
            elif a == "gelu":
                xa = jax.nn.gelu(xin, approximate=False)
        out = jnp.einsum("bdhw,ed->behw", xa, w2) + bias[None, :, None, None]
        return out[:, :D], out[:, D:]

    # Identity path (use_activation=False)
    mean, log_var = map_to_distribution_parameters_with_convolution(
        x, weight, bias, use_activation=False, activation="elu"
    )
    jax.block_until_ready((mean, log_var))
    rm, rv = ref_forward(x, False, "elu")
    assert mean.shape == (B, D, H, W) and log_var.shape == (B, D, H, W)
    assert jnp.allclose(mean, rm, atol=1e-5, rtol=1e-5)
    assert jnp.allclose(log_var, rv, atol=1e-5, rtol=1e-5)

    # Activation path (ELU)
    mean_a, log_var_a = map_to_distribution_parameters_with_convolution(
        x, weight, bias, use_activation=True, activation="elu"
    )
    jax.block_until_ready((mean_a, log_var_a))
    rma, rva = ref_forward(x, True, "elu")
    assert jnp.allclose(mean_a, rma, atol=1e-5, rtol=1e-5)
    assert jnp.allclose(log_var_a, rva, atol=1e-5, rtol=1e-5)

    print("KERNEL_OK")
</pallas_src>

<mosaic_0001>
module attributes {stable_mosaic.version = 11 : i64} {
  func.func @_pointwise_conv_kernel(%arg0: i32, %arg1: i32, %arg2: memref<1x4x256xf32, #tpu.memory_space<vmem>>, %arg3: memref<4x4xf32, #tpu.memory_space<vmem>>, %arg4: memref<4x4xf32, #tpu.memory_space<vmem>>, %arg5: memref<4x1xf32, #tpu.memory_space<vmem>>, %arg6: memref<4x1xf32, #tpu.memory_space<vmem>>, %arg7: memref<1x4x256xf32, #tpu.memory_space<vmem>>, %arg8: memref<1x4x256xf32, #tpu.memory_space<vmem>>) attributes {dimension_semantics = [#tpu.dimension_semantics<parallel>, #tpu.dimension_semantics<parallel>], iteration_bounds = array<i64: 2, 1>, scalar_prefetch = 0 : i64, scratch_operands = 0 : i64, tpu.core_type = #tpu.core_type<tc>, window_params = [{transform_indices = @transform_0, window_bounds = array<i64: 1, 4, 256>}, {pipeline_mode = #tpu.pipeline_mode<synchronous>, transform_indices = @transform_1, window_bounds = array<i64: 4, 4>}, {pipeline_mode = #tpu.pipeline_mode<synchronous>, transform_indices = @transform_2, window_bounds = array<i64: 4, 4>}, {pipeline_mode = #tpu.pipeline_mode<synchronous>, transform_indices = @transform_3, window_bounds = array<i64: 4, 1>}, {pipeline_mode = #tpu.pipeline_mode<synchronous>, transform_indices = @transform_4, window_bounds = array<i64: 4, 1>}, {transform_indices = @transform_5, window_bounds = array<i64: 1, 4, 256>}, {transform_indices = @transform_6, window_bounds = array<i64: 1, 4, 256>}]} {
    %c0 = arith.constant 0 : index
    %c0_0 = arith.constant 0 : index
    %c0_1 = arith.constant 0 : index
    %0 = vector.load %arg2[%c0, %c0_0, %c0_1] : memref<1x4x256xf32, #tpu.memory_space<vmem>>, vector<1x4x256xf32>
    %1 = vector.shape_cast %0 : vector<1x4x256xf32> to vector<4x256xf32>
    %c0_2 = arith.constant 0 : index
    %c0_3 = arith.constant 0 : index
    %2 = vector.load %arg3[%c0_2, %c0_3] : memref<4x4xf32, #tpu.memory_space<vmem>>, vector<4x4xf32>
    %c0_4 = arith.constant 0 : index
    %c0_5 = arith.constant 0 : index
    %3 = vector.load %arg4[%c0_4, %c0_5] : memref<4x4xf32, #tpu.memory_space<vmem>>, vector<4x4xf32>
    %4 = vector.extract_strided_slice %2 {offsets = [0, 0], sizes = [4, 1], strides = [1, 1]} : vector<4x4xf32> to vector<4x1xf32>
    %5 = vector.extract_strided_slice %1 {offsets = [0, 0], sizes = [1, 256], strides = [1, 1]} : vector<4x256xf32> to vector<1x256xf32>
    %6 = vector.broadcast %4 : vector<4x1xf32> to vector<4x256xf32>
    %7 = vector.broadcast %5 : vector<1x256xf32> to vector<4x256xf32>
    %8 = arith.mulf %6, %7 : vector<4x256xf32>
    %9 = vector.extract_strided_slice %2 {offsets = [0, 1], sizes = [4, 1], strides = [1, 1]} : vector<4x4xf32> to vector<4x1xf32>
    %10 = vector.extract_strided_slice %1 {offsets = [1, 0], sizes = [1, 256], strides = [1, 1]} : vector<4x256xf32> to vector<1x256xf32>
    %11 = vector.broadcast %9 : vector<4x1xf32> to vector<4x256xf32>
    %12 = vector.broadcast %10 : vector<1x256xf32> to vector<4x256xf32>
    %13 = arith.mulf %11, %12 : vector<4x256xf32>
    %14 = arith.addf %8, %13 : vector<4x256xf32>
    %15 = vector.extract_strided_slice %2 {offsets = [0, 2], sizes = [4, 1], strides = [1, 1]} : vector<4x4xf32> to vector<4x1xf32>
    %16 = vector.extract_strided_slice %1 {offsets = [2, 0], sizes = [1, 256], strides = [1, 1]} : vector<4x256xf32> to vector<1x256xf32>
    %17 = vector.broadcast %15 : vector<4x1xf32> to vector<4x256xf32>
    %18 = vector.broadcast %16 : vector<1x256xf32> to vector<4x256xf32>
    %19 = arith.mulf %17, %18 : vector<4x256xf32>
    %20 = arith.addf %14, %19 : vector<4x256xf32>
    %21 = vector.extract_strided_slice %2 {offsets = [0, 3], sizes = [4, 1], strides = [1, 1]} : vector<4x4xf32> to vector<4x1xf32>
    %22 = vector.extract_strided_slice %1 {offsets = [3, 0], sizes = [1, 256], strides = [1, 1]} : vector<4x256xf32> to vector<1x256xf32>
    %23 = vector.broadcast %21 : vector<4x1xf32> to vector<4x256xf32>
    %24 = vector.broadcast %22 : vector<1x256xf32> to vector<4x256xf32>
    %25 = arith.mulf %23, %24 : vector<4x256xf32>
    %26 = arith.addf %20, %25 : vector<4x256xf32>
    %c0_6 = arith.constant 0 : index
    %c0_7 = arith.constant 0 : index
    %27 = vector.load %arg5[%c0_6, %c0_7] : memref<4x1xf32, #tpu.memory_space<vmem>>, vector<4x1xf32>
    %28 = vector.broadcast %27 : vector<4x1xf32> to vector<4x256xf32>
    %29 = arith.addf %26, %28 : vector<4x256xf32>
    %30 = vector.extract_strided_slice %3 {offsets = [0, 0], sizes = [4, 1], strides = [1, 1]} : vector<4x4xf32> to vector<4x1xf32>
    %31 = vector.extract_strided_slice %1 {offsets = [0, 0], sizes = [1, 256], strides = [1, 1]} : vector<4x256xf32> to vector<1x256xf32>
    %32 = vector.broadcast %30 : vector<4x1xf32> to vector<4x256xf32>
    %33 = vector.broadcast %31 : vector<1x256xf32> to vector<4x256xf32>
    %34 = arith.mulf %32, %33 : vector<4x256xf32>
    %35 = vector.extract_strided_slice %3 {offsets = [0, 1], sizes = [4, 1], strides = [1, 1]} : vector<4x4xf32> to vector<4x1xf32>
    %36 = vector.extract_strided_slice %1 {offsets = [1, 0], sizes = [1, 256], strides = [1, 1]} : vector<4x256xf32> to vector<1x256xf32>
    %37 = vector.broadcast %35 : vector<4x1xf32> to vector<4x256xf32>
    %38 = vector.broadcast %36 : vector<1x256xf32> to vector<4x256xf32>
    %39 = arith.mulf %37, %38 : vector<4x256xf32>
    %40 = arith.addf %34, %39 : vector<4x256xf32>
    %41 = vector.extract_strided_slice %3 {offsets = [0, 2], sizes = [4, 1], strides = [1, 1]} : vector<4x4xf32> to vector<4x1xf32>
    %42 = vector.extract_strided_slice %1 {offsets = [2, 0], sizes = [1, 256], strides = [1, 1]} : vector<4x256xf32> to vector<1x256xf32>
    %43 = vector.broadcast %41 : vector<4x1xf32> to vector<4x256xf32>
    %44 = vector.broadcast %42 : vector<1x256xf32> to vector<4x256xf32>
    %45 = arith.mulf %43, %44 : vector<4x256xf32>
    %46 = arith.addf %40, %45 : vector<4x256xf32>
    %47 = vector.extract_strided_slice %3 {offsets = [0, 3], sizes = [4, 1], strides = [1, 1]} : vector<4x4xf32> to vector<4x1xf32>
    %48 = vector.extract_strided_slice %1 {offsets = [3, 0], sizes = [1, 256], strides = [1, 1]} : vector<4x256xf32> to vector<1x256xf32>
    %49 = vector.broadcast %47 : vector<4x1xf32> to vector<4x256xf32>
    %50 = vector.broadcast %48 : vector<1x256xf32> to vector<4x256xf32>
    %51 = arith.mulf %49, %50 : vector<4x256xf32>
    %52 = arith.addf %46, %51 : vector<4x256xf32>
    %c0_8 = arith.constant 0 : index
    %c0_9 = arith.constant 0 : index
    %53 = vector.load %arg6[%c0_8, %c0_9] : memref<4x1xf32, #tpu.memory_space<vmem>>, vector<4x1xf32>
    %54 = vector.broadcast %53 : vector<4x1xf32> to vector<4x256xf32>
    %55 = arith.addf %52, %54 : vector<4x256xf32>
    %c0_10 = arith.constant 0 : index
    %c0_11 = arith.constant 0 : index
    %c0_12 = arith.constant 0 : index
    %56 = vector.load %arg7[%c0_10, %c0_11, %c0_12] : memref<1x4x256xf32, #tpu.memory_space<vmem>>, vector<1x4x256xf32>
    %57 = vector.shape_cast %56 : vector<1x4x256xf32> to vector<4x256xf32>
    %58 = vector.shape_cast %29 : vector<4x256xf32> to vector<1x4x256xf32>
    tpu.vector_store %arg7[%c0_10, %c0_11, %c0_12], %58 {strides = array<i32>} : memref<1x4x256xf32, #tpu.memory_space<vmem>>, vector<1x4x256xf32>,
    %c0_13 = arith.constant 0 : index
    %c0_14 = arith.constant 0 : index
    %c0_15 = arith.constant 0 : index
    %59 = vector.load %arg8[%c0_13, %c0_14, %c0_15] : memref<1x4x256xf32, #tpu.memory_space<vmem>>, vector<1x4x256xf32>
    %60 = vector.shape_cast %59 : vector<1x4x256xf32> to vector<4x256xf32>
    %61 = vector.shape_cast %55 : vector<4x256xf32> to vector<1x4x256xf32>
    tpu.vector_store %arg8[%c0_13, %c0_14, %c0_15], %61 {strides = array<i32>} : memref<1x4x256xf32, #tpu.memory_space<vmem>>, vector<1x4x256xf32>,
    return
  }
  func.func @transform_0(%arg0: i32, %arg1: i32) -> (i32, i32, i32) {
    %c0_i32 = arith.constant 0 : i32
    %c0_i32_0 = arith.constant 0 : i32
    return %arg0, %c0_i32, %arg1 : i32, i32, i32
  }
  func.func @transform_1(%arg0: i32, %arg1: i32) -> (i32, i32) {
    %c0_i32 = arith.constant 0 : i32
    %c0_i32_0 = arith.constant 0 : i32
    %c0_i32_1 = arith.constant 0 : i32
    return %c0_i32, %c0_i32_0 : i32, i32
  }
  func.func @transform_2(%arg0: i32, %arg1: i32) -> (i32, i32) {
    %c0_i32 = arith.constant 0 : i32
    %c0_i32_0 = arith.constant 0 : i32
    %c0_i32_1 = arith.constant 0 : i32
    return %c0_i32, %c0_i32_0 : i32, i32
  }
  func.func @transform_3(%arg0: i32, %arg1: i32) -> (i32, i32) {
    %c0_i32 = arith.constant 0 : i32
    %c0_i32_0 = arith.constant 0 : i32
    %c0_i32_1 = arith.constant 0 : i32
    return %c0_i32, %c0_i32_0 : i32, i32
  }
  func.func @transform_4(%arg0: i32, %arg1: i32) -> (i32, i32) {
    %c0_i32 = arith.constant 0 : i32
    %c0_i32_0 = arith.constant 0 : i32
    %c0_i32_1 = arith.constant 0 : i32
    return %c0_i32, %c0_i32_0 : i32, i32
  }
  func.func @transform_5(%arg0: i32, %arg1: i32) -> (i32, i32, i32) {
    %c0_i32 = arith.constant 0 : i32
    %c0_i32_0 = arith.constant 0 : i32
    return %arg0, %c0_i32, %arg1 : i32, i32, i32
  }
  func.func @transform_6(%arg0: i32, %arg1: i32) -> (i32, i32, i32) {
    %c0_i32 = arith.constant 0 : i32
    %c0_i32_0 = arith.constant 0 : i32
    return %arg0, %c0_i32, %arg1 : i32, i32, i32
  }
}

</mosaic_0001>

<llo_original>
// kernel: tpu_custom_call.1
$region0: #{tpu_custom_call.1}
  #allocation0 [shape = 'u32[]', space=smem, size = 0x4, offset = 0x4, fixed_abs, tag = 'smem constant byte address 0x4 - core index']
  #allocation1 [shape = 'u32[72,128]{1,0:T(1,128)}', space=vmem, size = 0x9000, scoped, tag = 'internal scratch']
  %s0 = inlined_call_operand.hbm [shape: f32[2,4,256], index: 0, kind: input, shape index: {}]
  %s1 = inlined_call_operand.vmem [shape: f32[4,4], index: 1, kind: input, shape index: {}]
  %s2 = inlined_call_operand.vmem [shape: f32[4,4], index: 2, kind: input, shape index: {}]
  %s3 = inlined_call_operand.vmem [shape: f32[4,1], index: 3, kind: input, shape index: {}]
  %s4 = inlined_call_operand.vmem [shape: f32[4,1], index: 4, kind: input, shape index: {}]
  %s5 = inlined_call_operand.hbm [shape: f32[2,4,256], index: 5, kind: output, shape index: {0}]
  %s6 = inlined_call_operand.hbm [shape: f32[2,4,256], index: 6, kind: output, shape index: {1}]
  %7 = xla_tuple %s5, %s6
  %s8 = sld [smem:[#allocation0]]
  $region65: #{tpu_custom_call.1} parent=0
    _
  %s10 = ssub.s32 1, %s8
  %s11 = scalar_select 0, %s10, %s8
  $region1: #{tpu_custom_call.1} parent=0
    #allocation2 [shape = 'u8[8192]{0}', space=vmem, size = 0x2000, scoped, tag = 'input window, operand 0']
    #allocation3 [shape = 's32[2]{0}', space=sflag, size = 0x8, scoped, tag = 'scoped memory for tpu_custom_call.1']
    #allocation4 [shape = 's32[2]{0}', space=sflag, size = 0x8, scoped, tag = 'scoped memory for tpu_custom_call.1']
    #allocation5 [shape = 'u8[8192]{0}', space=vmem, size = 0x2000, scoped, tag = 'output window, operand 0']
    #allocation6 [shape = 'u8[8192]{0}', space=vmem, size = 0x2000, scoped, tag = 'output window, operand 1']
    #allocation7 [shape = 's32[2]{0}', space=sflag, size = 0x8, scoped, tag = 'scoped memory for tpu_custom_call.1']
    %12 = vsyncpa [#allocation3], 0
    %s13 = scalar_lea.sflag [#allocation3], 1
    %14 = vsyncpa %s13, 0
    %15 = vsyncpa [#allocation4], 0
    %s16 = scalar_lea.sflag [#allocation4], 1
    %17 = vsyncpa %s16, 0
    %18 = vsyncpa [#allocation7], 0
    %s19 = scalar_lea.sflag [#allocation7], 1
    %20 = vsyncpa %s19, 0
    loop: start=0, step=1, limit=4
    $region2: #{tpu_custom_call.1} parent=1 // loop_pre_header
      _
    $region3: #{tpu_custom_call.1} parent=1 // loop_header
      %s22 = sphi 0, %s26
      %p23 = scmp.ge.s32.totalorder %s22, 4
      %s29 = sphi 0, %s41
      %s30 = sphi 0, %s37
      %s31 = sphi 0, %s29
      %s32 = sphi 0, %s30
      %s33 = sphi 0, %s31
      %s34 = sphi 0, %s32
      %s46 = sphi 0, %s48
      %s49 = sphi 0, %s46
      %s50 = sphi 0, %s49
      %s66 = sphi 0, %s50
      %s70 = sphi 0, %s70
      %s72 = sphi 0, %s70
      %s73 = sphi 0, %s72
      %s87 = sphi 0, %s73
      %s91 = sphi 0, %s91
      %s93 = sphi 0, %s91
      %s94 = sphi 0, %s93
      %s108 = sphi 0, %s94
      %s112 = sphi 0, %s112
      %s114 = sphi 0, %s112
      %s115 = sphi 0, %s114
      %s129 = sphi 0, %s115
      %s133 = sphi 0, %s133
      %s135 = sphi 0, %s133
      %s136 = sphi 0, %s135
      %s150 = sphi 0, %s136
      %s158 = sphi 0, %s160
      %s161 = sphi 0, %s158
      %s162 = sphi 0, %s161
      %s178 = sphi 0, %s162
      %s186 = sphi 0, %s188
      %s189 = sphi 0, %s186
      %s190 = sphi 0, %s189
      %s206 = sphi 0, %s190
    $region4: #{tpu_custom_call.1} parent=1 // loop_header_branch
      %25 = sbr.rel (%p23) target = $region8
    $region5: #{tpu_custom_call.1} parent=1 // loop_body
      %s27 = ssub.s32 %s22, 1
      %s28 = ssub.s32 %s22, 2
      %s35 = sadd.s32 1, %s30
      %p36 = scmp.ge.s32.totalorder %s35, 1
      %s37 = scalar_select %p36, 0, %s35
      %s38 = sadd.s32 1, %s29
      %s39 = scalar_select %p36, %s38, %s29
      %p40 = scmp.ge.s32.totalorder %s39, 2
      %s41 = scalar_select %p40, 0, %s39
      %s42 = ssub.s32 %s29, %s41
      %s43 = ssub.s32 %s30, %s37
      %s44 = sor.u32 %s42, %s43
      %p45 = scmp.eq.s32.totalorder %s44, 0
      %s47 = sadd.s32 %s46, 1
      %s48 = scalar_select %p45, %s46, %s47
      %p51 = pneg %p45
      %p52 = scmp.eq.s32.totalorder %s22, 1
      %p53 = por %p51, %p52
      %p54 = scmp.ne.s32.totalorder %s46, %s49
      %p55 = scmp.eq.s32.totalorder %s22, 0
      %p56 = por %p54, %p55
      %p57 = scmp.ne.s32.totalorder %s46, %s49
      %p58 = scmp.eq.s32.totalorder %s27, 1
      %p59 = por %p57, %p58
      %p60 = scmp.ne.s32.totalorder %s49, %s50
      %p61 = scmp.eq.s32.totalorder %s27, 0
      %p62 = por %p60, %p61
      %p63 = scmp.ne.s32.totalorder %s49, %s50
      %p64 = scmp.eq.s32.totalorder %s28, 1
      %p65 = por %p63, %p64
      %p67 = scmp.ne.s32.totalorder %s50, %s66
      %p68 = scmp.eq.s32.totalorder %s28, 0
      %p69 = por %p67, %p68
      %s71 = sadd.s32 %s70, 1
      %p74 = scmp.eq.s32.totalorder %s22, 1
      %p75 = scmp.ne.s32.totalorder %s70, %s72
      %p76 = scmp.eq.s32.totalorder %s22, 0
      %p77 = por %p75, %p76
      %p78 = scmp.ne.s32.totalorder %s70, %s72
      %p79 = scmp.eq.s32.totalorder %s27, 1
      %p80 = por %p78, %p79
      %p81 = scmp.ne.s32.totalorder %s72, %s73
      %p82 = scmp.eq.s32.totalorder %s27, 0
      %p83 = por %p81, %p82
      %p84 = scmp.ne.s32.totalorder %s72, %s73
      %p85 = scmp.eq.s32.totalorder %s28, 1
      %p86 = por %p84, %p85
      %p88 = scmp.ne.s32.totalorder %s73, %s87
      %p89 = scmp.eq.s32.totalorder %s28, 0
      %p90 = por %p88, %p89
      %s92 = sadd.s32 %s91, 1
      %p95 = scmp.eq.s32.totalorder %s22, 1
      %p96 = scmp.ne.s32.totalorder %s91, %s93
      %p97 = scmp.eq.s32.totalorder %s22, 0
      %p98 = por %p96, %p97
      %p99 = scmp.ne.s32.totalorder %s91, %s93
      %p100 = scmp.eq.s32.totalorder %s27, 1
      %p101 = por %p99, %p100
      %p102 = scmp.ne.s32.totalorder %s93, %s94
      %p103 = scmp.eq.s32.totalorder %s27, 0
      %p104 = por %p102, %p103
      %p105 = scmp.ne.s32.totalorder %s93, %s94
      %p106 = scmp.eq.s32.totalorder %s28, 1
      %p107 = por %p105, %p106
      %p109 = scmp.ne.s32.totalorder %s94, %s108
      %p110 = scmp.eq.s32.totalorder %s28, 0
      %p111 = por %p109, %p110
      %s113 = sadd.s32 %s112, 1
      %p116 = scmp.eq.s32.totalorder %s22, 1
      %p117 = scmp.ne.s32.totalorder %s112, %s114
      %p118 = scmp.eq.s32.totalorder %s22, 0
      %p119 = por %p117, %p118
      %p120 = scmp.ne.s32.totalorder %s112, %s114
      %p121 = scmp.eq.s32.totalorder %s27, 1
      %p122 = por %p120, %p121
      %p123 = scmp.ne.s32.totalorder %s114, %s115
      %p124 = scmp.eq.s32.totalorder %s27, 0
      %p125 = por %p123, %p124
      %p126 = scmp.ne.s32.totalorder %s114, %s115
      %p127 = scmp.eq.s32.totalorder %s28, 1
      %p128 = por %p126, %p127
      %p130 = scmp.ne.s32.totalorder %s115, %s129
      %p131 = scmp.eq.s32.totalorder %s28, 0
      %p132 = por %p130, %p131
      %s134 = sadd.s32 %s133, 1
      %p137 = scmp.eq.s32.totalorder %s22, 1
      %p138 = scmp.ne.s32.totalorder %s133, %s135
      %p139 = scmp.eq.s32.totalorder %s22, 0
      %p140 = por %p138, %p139
      %p141 = scmp.ne.s32.totalorder %s133, %s135
      %p142 = scmp.eq.s32.totalorder %s27, 1
      %p143 = por %p141, %p142
      %p144 = scmp.ne.s32.totalorder %s135, %s136
      %p145 = scmp.eq.s32.totalorder %s27, 0
      %p146 = por %p144, %p145
      %p147 = scmp.ne.s32.totalorder %s135, %s136
      %p148 = scmp.eq.s32.totalorder %s28, 1
      %p149 = por %p147, %p148
      %p151 = scmp.ne.s32.totalorder %s136, %s150
      %p152 = scmp.eq.s32.totalorder %s28, 0
      %p153 = por %p151, %p152
      %s154 = ssub.s32 %s29, %s41
      %s155 = ssub.s32 %s30, %s37
      %s156 = sor.u32 %s154, %s155
      %p157 = scmp.eq.s32.totalorder %s156, 0
      %s159 = sadd.s32 %s158, 1
      %s160 = scalar_select %p157, %s158, %s159
      %p163 = pneg %p157
      %p164 = scmp.eq.s32.totalorder %s22, 1
      %p165 = por %p163, %p164
      %p166 = scmp.ne.s32.totalorder %s158, %s161
      %p167 = scmp.eq.s32.totalorder %s22, 0
      %p168 = por %p166, %p167
      %p169 = scmp.ne.s32.totalorder %s158, %s161
      %p170 = scmp.eq.s32.totalorder %s27, 1
      %p171 = por %p169, %p170
      %p172 = scmp.ne.s32.totalorder %s161, %s162
      %p173 = scmp.eq.s32.totalorder %s27, 0
      %p174 = por %p172, %p173
      %p175 = scmp.ne.s32.totalorder %s161, %s162
      %p176 = scmp.eq.s32.totalorder %s28, 1
      %p177 = por %p175, %p176
      %p179 = scmp.ne.s32.totalorder %s162, %s178
      %p180 = scmp.eq.s32.totalorder %s28, 0
      %p181 = por %p179, %p180
      %s182 = ssub.s32 %s29, %s41
      %s183 = ssub.s32 %s30, %s37
      %s184 = sor.u32 %s182, %s183
      %p185 = scmp.eq.s32.totalorder %s184, 0
      %s187 = sadd.s32 %s186, 1
      %s188 = scalar_select %p185, %s186, %s187
      %p191 = pneg %p185
      %p192 = scmp.eq.s32.totalorder %s22, 1
      %p193 = por %p191, %p192
      %p194 = scmp.ne.s32.totalorder %s186, %s189
      %p195 = scmp.eq.s32.totalorder %s22, 0
      %p196 = por %p194, %p195
      %p197 = scmp.ne.s32.totalorder %s186, %s189
      %p198 = scmp.eq.s32.totalorder %s27, 1
      %p199 = por %p197, %p198
      %p200 = scmp.ne.s32.totalorder %s189, %s190
      %p201 = scmp.eq.s32.totalorder %s27, 0
      %p202 = por %p200, %p201
      %p203 = scmp.ne.s32.totalorder %s189, %s190
      %p204 = scmp.eq.s32.totalorder %s28, 1
      %p205 = por %p203, %p204
      %p207 = scmp.ne.s32.totalorder %s190, %s206
      %p208 = scmp.eq.s32.totalorder %s28, 0
      %p209 = por %p207, %p208
      %p210 = scmp.le.s32.totalorder 1, %s22
      %p211 = scmp.lt.s32.totalorder %s22, 3
      %p212 = pnand %p210, %p211
      %p213 = pneg %p212
      // Predicated region
      $region9: #{tpu_custom_call.1} parent=5 // pred_check
        _
      $region10: #{tpu_custom_call.1} parent=5 // pred_check_branch
        %215 = sbr.rel (%p212) target = $region12
      $region11: #{tpu_custom_call.1} parent=5 // pred_region
        %s216 = ssub.s32 %s22, 1
        // Predicated region
        $region13: #{tpu_custom_call.1} parent=11 // pred_check
          %p217 = pneg %p83
        $region14: #{tpu_custom_call.1} parent=11 // pred_check_branch
          %219 = sbr.rel (%p217) target = $region16
        $region15: #{tpu_custom_call.1} parent=11 // pred_region
          _
        $region16: #{tpu_custom_call.1} parent=11 // pred_fallthru
          _
        // Predicated region
        $region17: #{tpu_custom_call.1} parent=11 // pred_check
          %p220 = pneg %p104
        $region18: #{tpu_custom_call.1} parent=11 // pred_check_branch
          %222 = sbr.rel (%p220) target = $region20
        $region19: #{tpu_custom_call.1} parent=11 // pred_region
          _
        $region20: #{tpu_custom_call.1} parent=11 // pred_fallthru
          _
        // Predicated region
        $region21: #{tpu_custom_call.1} parent=11 // pred_check
          %p223 = pneg %p125
        $region22: #{tpu_custom_call.1} parent=11 // pred_check_branch
          %225 = sbr.rel (%p223) target = $region24
        $region23: #{tpu_custom_call.1} parent=11 // pred_region
          _
        $region24: #{tpu_custom_call.1} parent=11 // pred_fallthru
          _
        // Predicated region
        $region25: #{tpu_custom_call.1} parent=11 // pred_check
          %p226 = pneg %p146
        $region26: #{tpu_custom_call.1} parent=11 // pred_check_branch
          %228 = sbr.rel (%p226) target = $region28
        $region27: #{tpu_custom_call.1} parent=11 // pred_region
          _
        $region28: #{tpu_custom_call.1} parent=11 // pred_fallthru
          _
      $region12: #{tpu_custom_call.1} parent=5 // pred_fallthru
        _
      %p229 = scmp.lt.s32.totalorder %s22, 2
      // Predicated region
      $region29: #{tpu_custom_call.1} parent=5 // pred_check
        %p230 = pneg %p229
      $region30: #{tpu_custom_call.1} parent=5 // pred_check_branch
        %232 = sbr.rel (%p230) target = $region32
      $region31: #{tpu_custom_call.1} parent=5 // pred_region
        // Predicated region
        $region33: #{tpu_custom_call.1} parent=31 // pred_check
          %p233 = pneg %p56
        $region34: #{tpu_custom_call.1} parent=31 // pred_check_branch
          %235 = sbr.rel (%p233) target = $region36
        $region35: #{tpu_custom_call.1} parent=31 // pred_region
          %s236 = sand.u32 %s46, 1
          %s237 = scalar_lea.sflag [#allocation3], %s236
          %s238 = sand.u32 %s46, 1
          %s239 = smul.addr %s238, 8
          %s240 = scalar_lea.vmem [#allocation2], %s239
          %s241 = smul.u32 2, %s30
          %243 = vsyncadd %s237, 0
          %s244 = smul.addr %s29, 2
          %s245 = sadd.s32 %s241, %s244
          %s246 = smul.addr %s245, 4
          %s247 = scalar_lea.hbm %s0, %s246
          %s249 = sshll.u32 %s247, 4
          %s250 = int_to_ptr.hbm [resolvable:$true] %s249
          %s251 = sshll.u32 %s240, 4
          %s252 = int_to_ptr.vmem [resolvable:$true] %s251
          %254 = dma.hbm_to_vmem [thread:$0]  %s250, 128, %s252, %s237
        $region36: #{tpu_custom_call.1} parent=31 // pred_fallthru
          _
      $region32: #{tpu_custom_call.1} parent=5 // pred_fallthru
        _
      %p255 = scmp.le.s32.totalorder 1, %s22
      %p256 = scmp.lt.s32.totalorder %s22, 3
      %p257 = pnand %p255, %p256
      %p258 = pneg %p257
      // Predicated region
      $region37: #{tpu_custom_call.1} parent=5 // pred_check
        _
      $region38: #{tpu_custom_call.1} parent=5 // pred_check_branch
        %260 = sbr.rel (%p257) target = $region40
      $region39: #{tpu_custom_call.1} parent=5 // pred_region
        %s261 = ssub.s32 %s22, 1
        %s262 = sand.u32 %s49, 1
        %s263 = scalar_lea.sflag [#allocation3], %s262
        %s264 = sand.u32 %s49, 1
        %s265 = smul.addr %s264, 8
        %s266 = scalar_lea.vmem [#allocation2], %s265
        // Predicated region
        $region41: #{tpu_custom_call.1} parent=39 // pred_check
          %p267 = pneg %p62
        $region42: #{tpu_custom_call.1} parent=39 // pred_check_branch
          %269 = sbr.rel (%p267) target = $region44
        $region43: #{tpu_custom_call.1} parent=39 // pred_region
          %271 = dma.done %s263, 128
        $region44: #{tpu_custom_call.1} parent=39 // pred_fallthru
          _
        %s272 = sand.u32 %s49, 1
        %s273 = scalar_lea.sflag [#allocation3], %s272
        %s274 = sand.u32 %s49, 1
        %s275 = smul.addr %s274, 8
        %s276 = scalar_lea.vmem [#allocation2], %s275
        %p277 = pneg %p62
        %p278 = pneg %p59
        %p279 = pneg %p83
        %p280 = pneg %p80
        %p281 = pneg %p104
        %p282 = pneg %p101
        %p283 = pneg %p125
        %p284 = pneg %p122
        %p285 = pneg %p146
        %p286 = pneg %p143
        %p287 = pneg %p174
        %p288 = pneg %p171
        %s289 = sand.u32 %s161, 1
        %s290 = scalar_lea.sflag [#allocation4], %s289
        %s291 = sand.u32 %s161, 1
        %s292 = smul.addr %s291, 8
        %s293 = scalar_lea.vmem [#allocation5], %s292
        %p294 = pneg %p202
        %p295 = pneg %p199
        %s296 = sand.u32 %s189, 1
        %s297 = scalar_lea.sflag [#allocation7], %s296
        %s298 = sand.u32 %s189, 1
        %s299 = smul.addr %s298, 8
        %s300 = scalar_lea.vmem [#allocation6], %s299
        %s301 = smul.u32 2, %s32
        %s302 = smul.u32 2, %s32
        %s303 = smul.u32 2, %s32
        %v304 = vld [vmem:[%s266] sm:$0xff]
        %v305 = vld [vmem:[%s1] sm:$0xf]
        %v306 = vld [vmem:[%s2] sm:$0xf]
        %308 = vset.pattern.permute.xlu0 0
        %309 = vperm.xlu0 %308, %v305
        %v310 = vpop.permute.xlu0 %309
        %v313 = vperm.slane %v304, 0
        %v314 = vperm.slane %v304, 4
        %v317 = vperm.slane %v313, 0
        %v318 = vperm.slane %v314, 0
        %v319 = vmul.f32 %v310, %v317
        %v320 = vmul.f32 %v310, %v318
        %321 = vset.pattern.permute.xlu0 1
        %322 = vperm.xlu0 %321, %v305
        %v323 = vpop.permute.xlu0 %322
        %v325 = vperm.slane %v304, 1
        %v326 = vperm.slane %v304, 5
        %v329 = vperm.slane %v325, 1
        %v330 = vperm.slane %v326, 1
        %v331 = vmul.f32 %v323, %v329
        %v332 = vmul.f32 %v323, %v330
        %v333 = vadd.f32 %v319, %v331
        %v334 = vadd.f32 %v320, %v332
        %335 = vset.pattern.permute.xlu0 2
        %336 = vperm.xlu0 %335, %v305
        %v337 = vpop.permute.xlu0 %336
        %v339 = vperm.slane %v304, 2
        %v340 = vperm.slane %v304, 6
        %v343 = vperm.slane %v339, 2
        %v344 = vperm.slane %v340, 2
        %v345 = vmul.f32 %v337, %v343
        %v346 = vmul.f32 %v337, %v344
        %v347 = vadd.f32 %v333, %v345
        %v348 = vadd.f32 %v334, %v346
        %349 = vset.pattern.permute.xlu0 3
        %350 = vperm.xlu0 %349, %v305
        %v351 = vpop.permute.xlu0 %350
        %v353 = vperm.slane %v304, 3
        %v354 = vperm.slane %v304, 7
        %v357 = vperm.slane %v353, 3
        %v358 = vperm.slane %v354, 3
        %v359 = vmul.f32 %v351, %v357
        %v360 = vmul.f32 %v351, %v358
        %v361 = vadd.f32 %v347, %v359
        %v362 = vadd.f32 %v348, %v360
        %v363 = vld [vmem:[%s3] sm:$0xf]
        %365 = vset.pattern.permute.xlu0 0
        %366 = vperm.xlu0 %365, %v363
        %v367 = vpop.permute.xlu0 %366
        %v369 = vadd.f32 %v361, %v367
        %v370 = vadd.f32 %v362, %v367
        %372 = vset.pattern.permute.xlu0 0
        %373 = vperm.xlu0 %372, %v306
        %v374 = vpop.permute.xlu0 %373
        %v376 = vmul.f32 %v374, %v317
        %v377 = vmul.f32 %v374, %v318
        %378 = vset.pattern.permute.xlu0 1
        %379 = vperm.xlu0 %378, %v306
        %v380 = vpop.permute.xlu0 %379
        %v382 = vmul.f32 %v380, %v329
        %v383 = vmul.f32 %v380, %v330
        %v384 = vadd.f32 %v376, %v382
        %v385 = vadd.f32 %v377, %v383
        %386 = vset.pattern.permute.xlu0 2
        %387 = vperm.xlu0 %386, %v306
        %v388 = vpop.permute.xlu0 %387
        %v390 = vmul.f32 %v388, %v343
        %v391 = vmul.f32 %v388, %v344
        %v392 = vadd.f32 %v384, %v390
        %v393 = vadd.f32 %v385, %v391
        %394 = vset.pattern.permute.xlu0 3
        %395 = vperm.xlu0 %394, %v306
        %v396 = vpop.permute.xlu0 %395
        %v398 = vmul.f32 %v396, %v357
        %v399 = vmul.f32 %v396, %v358
        %v400 = vadd.f32 %v392, %v398
        %v401 = vadd.f32 %v393, %v399
        %v402 = vld [vmem:[%s4] sm:$0xf]
        %404 = vset.pattern.permute.xlu0 0
        %405 = vperm.xlu0 %404, %v402
        %v406 = vpop.permute.xlu0 %405
        %v408 = vadd.f32 %v400, %v406
        %v409 = vadd.f32 %v401, %v406
        %v412 = vrot.slane %v370, 4
        %vm413 = vcmask 1043456
        %v414 = vsel %vm413, %v369, %v412
        %416 = vst [vmem:[%s293] sm:$0xff] %v414
        %v419 = vrot.slane %v409, 4
        %v420 = vsel %vm413, %v408, %v419
        %422 = vst [vmem:[%s300] sm:$0xff] %v420
        %s423 = sand.u32 %s161, 1
        %s424 = scalar_lea.sflag [#allocation4], %s423
        %s425 = sand.u32 %s161, 1
        %s426 = smul.addr %s425, 8
        %s427 = scalar_lea.vmem [#allocation5], %s426
        %s428 = sand.u32 %s189, 1
        %s429 = scalar_lea.sflag [#allocation7], %s428
        %s430 = sand.u32 %s189, 1
        %s431 = smul.addr %s430, 8
        %s432 = scalar_lea.vmem [#allocation6], %s431
        // Predicated region
        $region45: #{tpu_custom_call.1} parent=39 // pred_check
          %p433 = pneg %p171
        $region46: #{tpu_custom_call.1} parent=39 // pred_check_branch
          %435 = sbr.rel (%p433) target = $region48
        $region47: #{tpu_custom_call.1} parent=39 // pred_region
          %s436 = smul.u32 2, %s32
          %438 = vsyncadd %s424, 0
          %s439 = smul.addr %s31, 2
          %s440 = sadd.s32 %s436, %s439
          %s441 = smul.addr %s440, 4
          %s442 = scalar_lea.hbm %s5, %s441
          %s444 = sshll.u32 %s427, 4
          %s445 = int_to_ptr.vmem [resolvable:$true] %s444
          %s446 = sshll.u32 %s442, 4
          %s447 = int_to_ptr.hbm [resolvable:$true] %s446
          %449 = dma.vmem_to_hbm [thread:$0]  %s445, 128, %s447, %s424
        $region48: #{tpu_custom_call.1} parent=39 // pred_fallthru
          _
        // Predicated region
        $region49: #{tpu_custom_call.1} parent=39 // pred_check
          %p450 = pneg %p199
        $region50: #{tpu_custom_call.1} parent=39 // pred_check_branch
          %452 = sbr.rel (%p450) target = $region52
        $region51: #{tpu_custom_call.1} parent=39 // pred_region
          %s453 = smul.u32 2, %s32
          %455 = vsyncadd %s429, 0
          %s456 = smul.addr %s31, 2
          %s457 = sadd.s32 %s453, %s456
          %s458 = smul.addr %s457, 4
          %s459 = scalar_lea.hbm %s6, %s458
          %s461 = sshll.u32 %s432, 4
          %s462 = int_to_ptr.vmem [resolvable:$true] %s461
          %s463 = sshll.u32 %s459, 4
          %s464 = int_to_ptr.hbm [resolvable:$true] %s463
          %466 = dma.vmem_to_hbm [thread:$0]  %s462, 128, %s464, %s429
        $region52: #{tpu_custom_call.1} parent=39 // pred_fallthru
          _
      $region40: #{tpu_custom_call.1} parent=5 // pred_fallthru
        _
      %p467 = scmp.le.s32.totalorder 2, %s22
      // Predicated region
      $region53: #{tpu_custom_call.1} parent=5 // pred_check
        %p468 = pneg %p467
      $region54: #{tpu_custom_call.1} parent=5 // pred_check_branch
        %470 = sbr.rel (%p468) target = $region56
      $region55: #{tpu_custom_call.1} parent=5 // pred_region
        %s471 = ssub.s32 %s22, 2
        // Predicated region
        $region57: #{tpu_custom_call.1} parent=55 // pred_check
          %p472 = pneg %p177
        $region58: #{tpu_custom_call.1} parent=55 // pred_check_branch
          %474 = sbr.rel (%p472) target = $region60
        $region59: #{tpu_custom_call.1} parent=55 // pred_region
          %s475 = sand.u32 %s162, 1
          %s476 = scalar_lea.sflag [#allocation4], %s475
          %s477 = sand.u32 %s162, 1
          %s478 = smul.addr %s477, 8
          %s479 = scalar_lea.vmem [#allocation5], %s478
          %481 = dma.done %s476, 128
        $region60: #{tpu_custom_call.1} parent=55 // pred_fallthru
          _
        // Predicated region
        $region61: #{tpu_custom_call.1} parent=55 // pred_check
          %p482 = pneg %p205
        $region62: #{tpu_custom_call.1} parent=55 // pred_check_branch
          %484 = sbr.rel (%p482) target = $region64
        $region63: #{tpu_custom_call.1} parent=55 // pred_region
          %s485 = sand.u32 %s190, 1
          %s486 = scalar_lea.sflag [#allocation7], %s485
          %s487 = sand.u32 %s190, 1
          %s488 = smul.addr %s487, 8
          %s489 = scalar_lea.vmem [#allocation6], %s488
          %491 = dma.done %s486, 128
        $region64: #{tpu_custom_call.1} parent=55 // pred_fallthru
          _
      $region56: #{tpu_custom_call.1} parent=5 // pred_fallthru
        _
    $region6: #{tpu_custom_call.1} parent=1 // loop_footer
      %s26 = sadd.s32 1, %s22
    $region7: #{tpu_custom_call.1} parent=1 // loop_footer_branch
      %21 = sbr.rel target = $region3
    $region8: #{tpu_custom_call.1} parent=1 // loop_exit
      _
    %492 = vsyncpa [#allocation3], 1
    %s493 = scalar_lea.sflag [#allocation3], 1
    %494 = vsyncpa %s493, 1
    %495 = vsyncpa [#allocation4], 1
    %s496 = scalar_lea.sflag [#allocation4], 1
    %497 = vsyncpa %s496, 1
    %498 = vsyncpa [#allocation7], 1
    %s499 = scalar_lea.sflag [#allocation7], 1
    %500 = vsyncpa %s499, 1

</llo_original>
